<compile_context>
chip_gen: v5e
topology: v5e:2x2
jax: 0.10.0
libtpu: 0.0.40
codegen_flags: <defaults>
</compile_context>

<pallas_src>
import jax
import jax.numpy as jnp
from jax.experimental import pallas as pl
from jax.experimental.pallas import tpu as pltpu


def _make_fitnet_kernel(hw, tn, has_tail):
    """hw: true lane extent (H*W), tn: lane tile, has_tail: hw % tn != 0."""

    def kernel(x_ref, t_ref, w_ref, o_ref, acc_ref):
        # x_ref : [1, C_in,  TN]  student block (native dtype, straight to MXU)
        # t_ref : [1, C_out, TN]  teacher block (native dtype)
        # w_ref : [C_out, C_in]   1x1 conv weight, resident across the grid
        # o_ref : [1, 1, 128]     per-batch partial loss (f32, lane-broadcast)
        # acc_ref: [C_out, TN]    f32 running sum of squared residuals
        j = pl.program_id(1)

        @pl.when(j == 0)
        def _init():
            acc_ref[...] = jnp.zeros_like(acc_ref)

        # 1x1 conv == channel matmul; operands stay in their native dtype
        # (bf16 feeds the MXU directly), accumulation is f32.
        y = jnp.dot(w_ref[...], x_ref[0], preferred_element_type=jnp.float32)
        d = y - t_ref[0].astype(jnp.float32)                  # [C_out, TN] f32
        sq = d * d
        if has_tail:
            # Last lane tile overhangs H*W; padded block reads are unspecified,
            # so zero their contribution after the matmul (VPU select only).
            lane = jax.lax.broadcasted_iota(jnp.int32, sq.shape, 1)
            sq = jnp.where(lane < (hw - j * tn), sq, 0.0)
        acc_ref[...] += sq                                     # plain VPU adds

        @pl.when(j == pl.num_programs(1) - 1)
        def _finalize():
            total = jnp.sum(acc_ref[...])                      # one XLU reduce/batch
            o_ref[...] = jnp.broadcast_to(total, (1, 1, 128))

    return kernel


def _vmem_capacity_bytes():
    try:
        return int(pltpu.get_tpu_info().vmem_capacity_bytes)
    except Exception:
        return 64 << 20            # v7x per-TC VMEM; conservative fallback


def _pick_tile_n(hw, c_in, c_out, itemsize, max_tn, budget_bytes):
    """Lane-tile size: a multiple of 128 (or the full extent), VMEM-budgeted.

    Budget covers BOTH double-buffered streams, the double-buffered resident
    weight and the f32 accumulator (review correctness concern).
    """
    w_bytes = 2 * c_in * c_out * itemsize                     # 2x resident weight
    per_tn = 2 * (c_in + c_out) * itemsize + 4 * c_out        # 2x streams + f32 acc
    avail = max(budget_bytes - w_bytes - (1 << 20), per_tn * 128)
    cap = max(128, (avail // per_tn) // 128 * 128)
    cap = min(cap, max_tn)
    if hw <= cap:
        return hw, False                                      # full extent, no tail
    return cap, (hw % cap) != 0


def fitnet_loss_pallas(student, teacher, weight, *, max_tn=32768):
    """FitNet forward.

    student: [B, C_in, H, W] or [B, C_in]
    teacher: [B, C_out, H, W] or [B, C_out]
    weight : [C_out, C_in, 1, 1]   (nn.Conv2d(C_in, C_out, 1, bias=False))
    Returns scalar f32 loss = mean((conv1x1(student) - teacher) ** 2).
    """
    if student.ndim == 2:
        # dim()==2 branch: the 1x1 conv degenerates to a plain matmul; put the
        # B rows on the lane axis (tiny copy) so the same kernel layout is used.
        x3 = jnp.transpose(student, (1, 0))[None, :, :]       # [1, C_in,  B]
        t3 = jnp.transpose(teacher, (1, 0))[None, :, :]       # [1, C_out, B]
    else:
        b4, ci4, h4, w4 = student.shape
        x3 = student.reshape(b4, ci4, h4 * w4)                # free (contiguous)
        t3 = teacher.reshape(b4, teacher.shape[1], h4 * w4)   # free (contiguous)

    bn, c_in, hw = x3.shape
    c_out = t3.shape[1]
    # Weight is tiny; cast it to the streaming dtype so the MXU sees uniform
    # operands (no in-kernel upcasts of the big x tile).
    w2d = weight.reshape(weight.shape[0], weight.shape[1]).astype(x3.dtype)

    itemsize = jnp.dtype(x3.dtype).itemsize
    cap = _vmem_capacity_bytes()
    budget = min(int(cap * 0.45), 48 << 20)          # generation-aware tile budget
    max_tn = max(128, (max_tn // 128) * 128)
    tn, has_tail = _pick_tile_n(hw, c_in, c_out, itemsize, max_tn, budget)
    n_hw_tiles = pl.cdiv(hw, tn)

    vmem_needed = (2 * tn * (c_in + c_out) * itemsize         # double-buffered streams
                   + 2 * c_in * c_out * itemsize              # double-buffered weight
                   + 4 * c_out * tn                           # f32 accumulator
                   + (2 << 20))                               # output bufs + slack
    vmem_limit = int(min(cap * 0.85, max(2 * vmem_needed, 32 << 20)))

    cost = pl.CostEstimate(
        flops=2 * bn * hw * c_in * c_out,
        transcendentals=0,
        bytes_accessed=itemsize * bn * hw * (c_in + c_out)
        + itemsize * c_in * c_out + 4 * bn * 128,
    )

    out = pl.pallas_call(
        _make_fitnet_kernel(hw, tn, has_tail),
        out_shape=jax.ShapeDtypeStruct((bn, 1, 128), jnp.float32),
        grid_spec=pltpu.PrefetchScalarGridSpec(
            num_scalar_prefetch=0,
            grid=(bn, n_hw_tiles),
            in_specs=[
                pl.BlockSpec((1, c_in, tn), lambda b, j: (b, 0, j)),   # student
                pl.BlockSpec((1, c_out, tn), lambda b, j: (b, 0, j)),  # teacher
                pl.BlockSpec((c_out, c_in), lambda b, j: (0, 0)),      # weight
            ],
            out_specs=pl.BlockSpec((1, 1, 128), lambda b, j: (b, 0, 0)),
            scratch_shapes=[pltpu.VMEM((c_out, tn), jnp.float32)],
        ),
        compiler_params=pltpu.CompilerParams(
            # Batch axis may shard across TensorCores (v7x megacore); the H*W
            # axis is the reduction carried by the accumulator.
            dimension_semantics=("parallel", "arbitrary"),
            vmem_limit_bytes=vmem_limit,
        ),
        cost_estimate=cost,
    )(x3, t3, w2d)

    denom = bn * hw * c_out                                   # true element count
    return jnp.sum(out[:, 0, 0]) / jnp.float32(denom)


def _reference(student, teacher, weight):
    """Pure-JAX mirror of the PyTorch forward."""
    if student.ndim == 2:
        student = student[:, :, None, None]
        teacher = teacher[:, :, None, None]
    w2d = weight.reshape(weight.shape[0], weight.shape[1])     # [C_out, C_in]
    y = jnp.einsum("bihw,oi->bohw", student, w2d)              # 1x1 conv, no bias
    return jnp.mean((y - teacher) ** 2)


if __name__ == "__main__":
    key = jax.random.PRNGKey(0)
    k1, k2, k3 = jax.random.split(key, 3)

    B, C_in, C_out, H, W = 2, 4, 8, 16, 16
    student = jax.random.normal(k1, (B, C_in, H, W), dtype=jnp.float32)
    teacher = jax.random.normal(k2, (B, C_out, H, W), dtype=jnp.float32)
    # nn.Conv2d(in, out, 1, bias=False) weight, init uniform_(-0.005, 0.005)
    weight = jax.random.uniform(
        k3, (C_out, C_in, 1, 1), minval=-0.005, maxval=0.005, dtype=jnp.float32
    )

    # 4-D path, forced to a multi-tile grid over H*W (init/accumulate/finalize).
    loss = jax.block_until_ready(
        fitnet_loss_pallas(student, teacher, weight, max_tn=128))
    ref = _reference(student, teacher, weight)
    assert jnp.allclose(loss, ref, rtol=1e-5, atol=1e-6), (loss, ref)

    # Ragged H*W (12*12 = 144 with 128-wide tiles): tail masked in-kernel, no pad.
    s3 = jax.random.normal(k1, (B, C_in, 12, 12), dtype=jnp.float32)
    t3 = jax.random.normal(k2, (B, C_out, 12, 12), dtype=jnp.float32)
    loss3 = jax.block_until_ready(fitnet_loss_pallas(s3, t3, weight, max_tn=128))
    ref3 = _reference(s3, t3, weight)
    assert jnp.allclose(loss3, ref3, rtol=1e-5, atol=1e-6), (loss3, ref3)

    # 2-D path (student.dim() == 2 branch of the PyTorch forward).
    s2 = jax.random.normal(k1, (B, C_in), dtype=jnp.float32)
    t2 = jax.random.normal(k2, (B, C_out), dtype=jnp.float32)
    loss2 = jax.block_until_ready(fitnet_loss_pallas(s2, t2, weight))
    ref2 = _reference(s2, t2, weight)
    assert jnp.allclose(loss2, ref2, rtol=1e-5, atol=1e-6), (loss2, ref2)

    print("KERNEL_OK")
</pallas_src>

<mosaic_0001>
module attributes {stable_mosaic.version = 11 : i64} {
  func.func @kernel(%arg0: i32, %arg1: i32, %arg2: memref<1x4x128xf32, #tpu.memory_space<vmem>>, %arg3: memref<1x8x128xf32, #tpu.memory_space<vmem>>, %arg4: memref<8x4xf32, #tpu.memory_space<vmem>>, %arg5: memref<1x1x128xf32, #tpu.memory_space<vmem>>, %arg6: memref<8x128xf32, #tpu.memory_space<vmem>>) attributes {dimension_semantics = [#tpu.dimension_semantics<parallel>, #tpu.dimension_semantics<arbitrary>], iteration_bounds = array<i64: 2, 2>, scalar_prefetch = 0 : i64, scratch_operands = 1 : i64, tpu.core_type = #tpu.core_type<tc>, window_params = [{transform_indices = @transform_0, window_bounds = array<i64: 1, 4, 128>}, {transform_indices = @transform_1, window_bounds = array<i64: 1, 8, 128>}, {pipeline_mode = #tpu.pipeline_mode<synchronous>, transform_indices = @transform_2, window_bounds = array<i64: 8, 4>}, {transform_indices = @transform_3, window_bounds = array<i64: 1, 1, 128>}]} {
    %c0_i32 = arith.constant 0 : i32
    %0 = arith.cmpi eq, %arg1, %c0_i32 : i32
    %1 = arith.extui %0 : i1 to i32
    %c0_i32_0 = arith.constant 0 : i32
    %2 = arith.cmpi ne, %1, %c0_i32_0 : i32
    scf.if %2 {
      %cst_13 = arith.constant 0.000000e+00 : f32
      %17 = vector.broadcast %cst_13 : f32 to vector<8x128xf32>
      %c0_14 = arith.constant 0 : index
      %c0_15 = arith.constant 0 : index
      %18 = vector.load %arg6[%c0_14, %c0_15] : memref<8x128xf32, #tpu.memory_space<vmem>>, vector<8x128xf32>
      tpu.vector_store %arg6[%c0_14, %c0_15], %17 {strides = array<i32>} : memref<8x128xf32, #tpu.memory_space<vmem>>, vector<8x128xf32>,
    } else {
    }
    %c0 = arith.constant 0 : index
    %c0_1 = arith.constant 0 : index
    %3 = vector.load %arg4[%c0, %c0_1] : memref<8x4xf32, #tpu.memory_space<vmem>>, vector<8x4xf32>
    %c0_2 = arith.constant 0 : index
    %c0_3 = arith.constant 0 : index
    %c0_4 = arith.constant 0 : index
    %4 = vector.load %arg2[%c0_2, %c0_3, %c0_4] : memref<1x4x128xf32, #tpu.memory_space<vmem>>, vector<1x4x128xf32>
    %5 = vector.shape_cast %4 : vector<1x4x128xf32> to vector<4x128xf32>
    %cst = arith.constant dense<0.000000e+00> : vector<8x128xf32>
    %6 = tpu.matmul %3, %5, %cst {dimension_numbers = #tpu.dot_dimension_numbers<[1], [0], [0], [1], [0, 0, 1, 1], [], []>} : vector<8x4xf32>, vector<4x128xf32>, vector<8x128xf32> -> vector<8x128xf32>
    %c0_5 = arith.constant 0 : index
    %c0_6 = arith.constant 0 : index
    %c0_7 = arith.constant 0 : index
    %7 = vector.load %arg3[%c0_5, %c0_6, %c0_7] : memref<1x8x128xf32, #tpu.memory_space<vmem>>, vector<1x8x128xf32>
    %8 = vector.shape_cast %7 : vector<1x8x128xf32> to vector<8x128xf32>
    %9 = arith.subf %6, %8 : vector<8x128xf32>
    %10 = arith.mulf %9, %9 : vector<8x128xf32>
    %c0_8 = arith.constant 0 : index
    %c0_9 = arith.constant 0 : index
    %11 = vector.load %arg6[%c0_8, %c0_9] : memref<8x128xf32, #tpu.memory_space<vmem>>, vector<8x128xf32>
    %12 = arith.addf %11, %10 : vector<8x128xf32>
    %c0_10 = arith.constant 0 : index
    %c0_11 = arith.constant 0 : index
    %13 = vector.load %arg6[%c0_10, %c0_11] : memref<8x128xf32, #tpu.memory_space<vmem>>, vector<8x128xf32>
    tpu.vector_store %arg6[%c0_10, %c0_11], %12 {strides = array<i32>} : memref<8x128xf32, #tpu.memory_space<vmem>>, vector<8x128xf32>,
    %c1_i32 = arith.constant 1 : i32
    %14 = arith.cmpi eq, %arg1, %c1_i32 : i32
    %15 = arith.extui %14 : i1 to i32
    %c0_i32_12 = arith.constant 0 : i32
    %16 = arith.cmpi ne, %15, %c0_i32_12 : i32
    scf.if %16 {
      %c0_13 = arith.constant 0 : index
      %c0_14 = arith.constant 0 : index
      %17 = vector.load %arg6[%c0_13, %c0_14] : memref<8x128xf32, #tpu.memory_space<vmem>>, vector<8x128xf32>
      %18 = vector.shape_cast %17 : vector<8x128xf32> to vector<1x8x128xf32>
      %cst_15 = arith.constant dense<0.000000e+00> : vector<1xf32>
      %19 = vector.multi_reduction <add>, %18, %cst_15 [1, 2] : vector<1x8x128xf32> to vector<1xf32>
      %20 = vector.shape_cast %19 : vector<1xf32> to vector<1x1x1xf32>
      %21 = vector.extract %20[0, 0, 0] : f32 from vector<1x1x1xf32>
      %22 = vector.broadcast %21 : f32 to vector<1x1x128xf32>
      %c0_16 = arith.constant 0 : index
      %c0_17 = arith.constant 0 : index
      %c0_18 = arith.constant 0 : index
      %23 = vector.load %arg5[%c0_16, %c0_17, %c0_18] : memref<1x1x128xf32, #tpu.memory_space<vmem>>, vector<1x1x128xf32>
      tpu.vector_store %arg5[%c0_16, %c0_17, %c0_18], %22 {strides = array<i32>} : memref<1x1x128xf32, #tpu.memory_space<vmem>>, vector<1x1x128xf32>,
    } else {
    }
    return
  }
  func.func @transform_0(%arg0: i32, %arg1: i32) -> (i32, i32, i32) {
    %c0_i32 = arith.constant 0 : i32
    %c0_i32_0 = arith.constant 0 : i32
    return %arg0, %c0_i32, %arg1 : i32, i32, i32
  }
  func.func @transform_1(%arg0: i32, %arg1: i32) -> (i32, i32, i32) {
    %c0_i32 = arith.constant 0 : i32
    %c0_i32_0 = arith.constant 0 : i32
    return %arg0, %c0_i32, %arg1 : i32, i32, i32
  }
  func.func @transform_2(%arg0: i32, %arg1: i32) -> (i32, i32) {
    %c0_i32 = arith.constant 0 : i32
    %c0_i32_0 = arith.constant 0 : i32
    %c0_i32_1 = arith.constant 0 : i32
    return %c0_i32, %c0_i32_0 : i32, i32
  }
  func.func @transform_3(%arg0: i32, %arg1: i32) -> (i32, i32, i32) {
    %c0_i32 = arith.constant 0 : i32
    %c0_i32_0 = arith.constant 0 : i32
    %c0_i32_1 = arith.constant 0 : i32
    return %arg0, %c0_i32, %c0_i32_0 : i32, i32, i32
  }
}

</mosaic_0001>

<llo_original>
// kernel: tpu_custom_call.1
$region0: #{tpu_custom_call.1}
  #allocation0 [shape = 'u32[]', space=smem, size = 0x4, offset = 0x4, fixed_abs, tag = 'smem constant byte address 0x4 - core index']
  #allocation1 [shape = 'u32[72,128]{1,0:T(1,128)}', space=vmem, size = 0x9000, scoped, tag = 'internal scratch']
  #allocation2 [shape = 'f32[8,128]{1,0:T(8,128)}', space=vmem, size = 0x1000, scoped, tag = 'scratch operand']
  %s0 = inlined_call_operand.hbm [shape: f32[2,4,256], index: 0, kind: input, shape index: {}]
  %s1 = inlined_call_operand.hbm [shape: f32[2,8,256], index: 1, kind: input, shape index: {}]
  %s2 = inlined_call_operand.vmem [shape: f32[8,4], index: 2, kind: input, shape index: {}]
  %s3 = inlined_call_operand.hbm [shape: f32[2,1,128], index: 3, kind: output, shape index: {}]
  %s4 = sld [smem:[#allocation0]]
  $region61: #{tpu_custom_call.1} parent=0
    _
  %s6 = ssub.s32 1, %s4
  %s7 = scalar_select 0, %s6, %s4
  $region1: #{tpu_custom_call.1} parent=0
    #allocation3 [shape = 'u8[4096]{0}', space=vmem, size = 0x1000, scoped, tag = 'input window, operand 0']
    #allocation4 [shape = 's32[2]{0}', space=sflag, size = 0x8, scoped, tag = 'scoped memory for tpu_custom_call.1']
    #allocation5 [shape = 's32[2]{0}', space=sflag, size = 0x8, scoped, tag = 'scoped memory for tpu_custom_call.1']
    #allocation6 [shape = 'u8[8192]{0}', space=vmem, size = 0x2000, scoped, tag = 'input window, operand 1']
    #allocation7 [shape = 's32[2]{0}', space=sflag, size = 0x8, scoped, tag = 'scoped memory for tpu_custom_call.1']
    #allocation8 [shape = 'u8[1024]{0}', space=vmem, size = 0x400, scoped, tag = 'output window, operand 0']
    %8 = vsyncpa [#allocation4], 0
    %s9 = scalar_lea.sflag [#allocation4], 1
    %10 = vsyncpa %s9, 0
    %11 = vsyncpa [#allocation7], 0
    %s12 = scalar_lea.sflag [#allocation7], 1
    %13 = vsyncpa %s12, 0
    %14 = vsyncpa [#allocation5], 0
    %s15 = scalar_lea.sflag [#allocation5], 1
    %16 = vsyncpa %s15, 0
    loop: start=0, step=1, limit=6
    $region2: #{tpu_custom_call.1} parent=1 // loop_pre_header
      _
    $region3: #{tpu_custom_call.1} parent=1 // loop_header
      %s18 = sphi 0, %s22
      %p19 = scmp.ge.s32.totalorder %s18, 6
      %s25 = sphi 0, %s37
      %s26 = sphi 0, %s33
      %s27 = sphi 0, %s25
      %s28 = sphi 0, %s26
      %s29 = sphi 0, %s27
      %s30 = sphi 0, %s28
      %s42 = sphi 0, %s44
      %s45 = sphi 0, %s42
      %s46 = sphi 0, %s45
      %s62 = sphi 0, %s46
      %s70 = sphi 0, %s72
      %s73 = sphi 0, %s70
      %s74 = sphi 0, %s73
      %s90 = sphi 0, %s74
      %s94 = sphi 0, %s94
      %s96 = sphi 0, %s94
      %s97 = sphi 0, %s96
      %s111 = sphi 0, %s97
      %s117 = sphi 0, %s119
      %s120 = sphi 0, %s117
      %s121 = sphi 0, %s120
      %s137 = sphi 0, %s121
    $region4: #{tpu_custom_call.1} parent=1 // loop_header_branch
      %21 = sbr.rel (%p19) target = $region8
    $region5: #{tpu_custom_call.1} parent=1 // loop_body
      %s23 = ssub.s32 %s18, 1
      %s24 = ssub.s32 %s18, 2
      %s31 = sadd.s32 1, %s26
      %p32 = scmp.ge.s32.totalorder %s31, 2
      %s33 = scalar_select %p32, 0, %s31
      %s34 = sadd.s32 1, %s25
      %s35 = scalar_select %p32, %s34, %s25
      %p36 = scmp.ge.s32.totalorder %s35, 2
      %s37 = scalar_select %p36, 0, %s35
      %s38 = ssub.s32 %s25, %s37
      %s39 = ssub.s32 %s26, %s33
      %s40 = sor.u32 %s38, %s39
      %p41 = scmp.eq.s32.totalorder %s40, 0
      %s43 = sadd.s32 %s42, 1
      %s44 = scalar_select %p41, %s42, %s43
      %p47 = pneg %p41
      %p48 = scmp.eq.s32.totalorder %s18, 3
      %p49 = por %p47, %p48
      %p50 = scmp.ne.s32.totalorder %s42, %s45
      %p51 = scmp.eq.s32.totalorder %s18, 0
      %p52 = por %p50, %p51
      %p53 = scmp.ne.s32.totalorder %s42, %s45
      %p54 = scmp.eq.s32.totalorder %s23, 3
      %p55 = por %p53, %p54
      %p56 = scmp.ne.s32.totalorder %s45, %s46
      %p57 = scmp.eq.s32.totalorder %s23, 0
      %p58 = por %p56, %p57
      %p59 = scmp.ne.s32.totalorder %s45, %s46
      %p60 = scmp.eq.s32.totalorder %s24, 3
      %p61 = por %p59, %p60
      %p63 = scmp.ne.s32.totalorder %s46, %s62
      %p64 = scmp.eq.s32.totalorder %s24, 0
      %p65 = por %p63, %p64
      %s66 = ssub.s32 %s25, %s37
      %s67 = ssub.s32 %s26, %s33
      %s68 = sor.u32 %s66, %s67
      %p69 = scmp.eq.s32.totalorder %s68, 0
      %s71 = sadd.s32 %s70, 1
      %s72 = scalar_select %p69, %s70, %s71
      %p75 = pneg %p69
      %p76 = scmp.eq.s32.totalorder %s18, 3
      %p77 = por %p75, %p76
      %p78 = scmp.ne.s32.totalorder %s70, %s73
      %p79 = scmp.eq.s32.totalorder %s18, 0
      %p80 = por %p78, %p79
      %p81 = scmp.ne.s32.totalorder %s70, %s73
      %p82 = scmp.eq.s32.totalorder %s23, 3
      %p83 = por %p81, %p82
      %p84 = scmp.ne.s32.totalorder %s73, %s74
      %p85 = scmp.eq.s32.totalorder %s23, 0
      %p86 = por %p84, %p85
      %p87 = scmp.ne.s32.totalorder %s73, %s74
      %p88 = scmp.eq.s32.totalorder %s24, 3
      %p89 = por %p87, %p88
      %p91 = scmp.ne.s32.totalorder %s74, %s90
      %p92 = scmp.eq.s32.totalorder %s24, 0
      %p93 = por %p91, %p92
      %s95 = sadd.s32 %s94, 1
      %p98 = scmp.eq.s32.totalorder %s18, 3
      %p99 = scmp.ne.s32.totalorder %s94, %s96
      %p100 = scmp.eq.s32.totalorder %s18, 0
      %p101 = por %p99, %p100
      %p102 = scmp.ne.s32.totalorder %s94, %s96
      %p103 = scmp.eq.s32.totalorder %s23, 3
      %p104 = por %p102, %p103
      %p105 = scmp.ne.s32.totalorder %s96, %s97
      %p106 = scmp.eq.s32.totalorder %s23, 0
      %p107 = por %p105, %p106
      %p108 = scmp.ne.s32.totalorder %s96, %s97
      %p109 = scmp.eq.s32.totalorder %s24, 3
      %p110 = por %p108, %p109
      %p112 = scmp.ne.s32.totalorder %s97, %s111
      %p113 = scmp.eq.s32.totalorder %s24, 0
      %p114 = por %p112, %p113
      %s115 = ssub.s32 %s25, %s37
      %p116 = scmp.eq.s32.totalorder %s115, 0
      %s118 = sadd.s32 %s117, 1
      %s119 = scalar_select %p116, %s117, %s118
      %p122 = pneg %p116
      %p123 = scmp.eq.s32.totalorder %s18, 3
      %p124 = por %p122, %p123
      %p125 = scmp.ne.s32.totalorder %s117, %s120
      %p126 = scmp.eq.s32.totalorder %s18, 0
      %p127 = por %p125, %p126
      %p128 = scmp.ne.s32.totalorder %s117, %s120
      %p129 = scmp.eq.s32.totalorder %s23, 3
      %p130 = por %p128, %p129
      %p131 = scmp.ne.s32.totalorder %s120, %s121
      %p132 = scmp.eq.s32.totalorder %s23, 0
      %p133 = por %p131, %p132
      %p134 = scmp.ne.s32.totalorder %s120, %s121
      %p135 = scmp.eq.s32.totalorder %s24, 3
      %p136 = por %p134, %p135
      %p138 = scmp.ne.s32.totalorder %s121, %s137
      %p139 = scmp.eq.s32.totalorder %s24, 0
      %p140 = por %p138, %p139
      %p141 = scmp.le.s32.totalorder 1, %s18
      %p142 = scmp.lt.s32.totalorder %s18, 5
      %p143 = pnand %p141, %p142
      %p144 = pneg %p143
      // Predicated region
      $region9: #{tpu_custom_call.1} parent=5 // pred_check
        _
      $region10: #{tpu_custom_call.1} parent=5 // pred_check_branch
        %146 = sbr.rel (%p143) target = $region12
      $region11: #{tpu_custom_call.1} parent=5 // pred_region
        %s147 = ssub.s32 %s18, 1
        // Predicated region
        $region13: #{tpu_custom_call.1} parent=11 // pred_check
          %p148 = pneg %p107
        $region14: #{tpu_custom_call.1} parent=11 // pred_check_branch
          %150 = sbr.rel (%p148) target = $region16
        $region15: #{tpu_custom_call.1} parent=11 // pred_region
          _
        $region16: #{tpu_custom_call.1} parent=11 // pred_fallthru
          _
      $region12: #{tpu_custom_call.1} parent=5 // pred_fallthru
        _
      %p151 = scmp.lt.s32.totalorder %s18, 4
      // Predicated region
      $region17: #{tpu_custom_call.1} parent=5 // pred_check
        %p152 = pneg %p151
      $region18: #{tpu_custom_call.1} parent=5 // pred_check_branch
        %154 = sbr.rel (%p152) target = $region20
      $region19: #{tpu_custom_call.1} parent=5 // pred_region
        // Predicated region
        $region21: #{tpu_custom_call.1} parent=19 // pred_check
          %p155 = pneg %p52
        $region22: #{tpu_custom_call.1} parent=19 // pred_check_branch
          %157 = sbr.rel (%p155) target = $region24
        $region23: #{tpu_custom_call.1} parent=19 // pred_region
          %s158 = sand.u32 %s42, 1
          %s159 = scalar_lea.sflag [#allocation4], %s158
          %s160 = sand.u32 %s42, 1
          %s161 = smul.addr %s160, 4
          %s162 = scalar_lea.vmem [#allocation3], %s161
          %164 = vsyncadd %s159, 0
          %s165 = smul.addr %s25, 2
          %s166 = sadd.s32 %s26, %s165
          %s167 = smul.addr %s166, 4
          %s168 = scalar_lea.hbm %s0, %s167
          %s170 = sshll.u32 %s168, 4
          %s171 = int_to_ptr.hbm [resolvable:$true] %s170
          %s172 = sshll.u32 %s162, 4
          %s173 = int_to_ptr.vmem [resolvable:$true] %s172
          %175 = dma.hbm_to_vmem [thread:$0]  %s171, 64, %s173, %s159
        $region24: #{tpu_custom_call.1} parent=19 // pred_fallthru
          _
        // Predicated region
        $region25: #{tpu_custom_call.1} parent=19 // pred_check
          %p176 = pneg %p80
        $region26: #{tpu_custom_call.1} parent=19 // pred_check_branch
          %178 = sbr.rel (%p176) target = $region28
        $region27: #{tpu_custom_call.1} parent=19 // pred_region
          %s179 = sand.u32 %s70, 1
          %s180 = scalar_lea.sflag [#allocation7], %s179
          %s181 = sand.u32 %s70, 1
          %s182 = smul.addr %s181, 8
          %s183 = scalar_lea.vmem [#allocation6], %s182
          %185 = vsyncadd %s180, 0
          %s186 = smul.addr %s25, 2
          %s187 = sadd.s32 %s26, %s186
          %s188 = smul.addr %s187, 8
          %s189 = scalar_lea.hbm %s1, %s188
          %s191 = sshll.u32 %s189, 4
          %s192 = int_to_ptr.hbm [resolvable:$true] %s191
          %s193 = sshll.u32 %s183, 4
          %s194 = int_to_ptr.vmem [resolvable:$true] %s193
          %196 = dma.hbm_to_vmem [thread:$0]  %s192, 128, %s194, %s180
        $region28: #{tpu_custom_call.1} parent=19 // pred_fallthru
          _
      $region20: #{tpu_custom_call.1} parent=5 // pred_fallthru
        _
      %p197 = scmp.le.s32.totalorder 1, %s18
      %p198 = scmp.lt.s32.totalorder %s18, 5
      %p199 = pnand %p197, %p198
      %p200 = pneg %p199
      // Predicated region
      $region29: #{tpu_custom_call.1} parent=5 // pred_check
        _
      $region30: #{tpu_custom_call.1} parent=5 // pred_check_branch
        %202 = sbr.rel (%p199) target = $region32
      $region31: #{tpu_custom_call.1} parent=5 // pred_region
        %s203 = ssub.s32 %s18, 1
        %s204 = sand.u32 %s45, 1
        %s205 = scalar_lea.sflag [#allocation4], %s204
        %s206 = sand.u32 %s45, 1
        %s207 = smul.addr %s206, 4
        %s208 = scalar_lea.vmem [#allocation3], %s207
        // Predicated region
        $region33: #{tpu_custom_call.1} parent=31 // pred_check
          %p209 = pneg %p58
        $region34: #{tpu_custom_call.1} parent=31 // pred_check_branch
          %211 = sbr.rel (%p209) target = $region36
        $region35: #{tpu_custom_call.1} parent=31 // pred_region
          %213 = dma.done %s205, 64
        $region36: #{tpu_custom_call.1} parent=31 // pred_fallthru
          _
        %s214 = sand.u32 %s73, 1
        %s215 = scalar_lea.sflag [#allocation7], %s214
        %s216 = sand.u32 %s73, 1
        %s217 = smul.addr %s216, 8
        %s218 = scalar_lea.vmem [#allocation6], %s217
        // Predicated region
        $region37: #{tpu_custom_call.1} parent=31 // pred_check
          %p219 = pneg %p86
        $region38: #{tpu_custom_call.1} parent=31 // pred_check_branch
          %221 = sbr.rel (%p219) target = $region40
        $region39: #{tpu_custom_call.1} parent=31 // pred_region
          %223 = dma.done %s215, 128
        $region40: #{tpu_custom_call.1} parent=31 // pred_fallthru
          _
        %s224 = sand.u32 %s45, 1
        %s225 = scalar_lea.sflag [#allocation4], %s224
        %s226 = sand.u32 %s45, 1
        %s227 = smul.addr %s226, 4
        %s228 = scalar_lea.vmem [#allocation3], %s227
        %p229 = pneg %p58
        %p230 = pneg %p55
        %s231 = sand.u32 %s73, 1
        %s232 = scalar_lea.sflag [#allocation7], %s231
        %s233 = sand.u32 %s73, 1
        %s234 = smul.addr %s233, 8
        %s235 = scalar_lea.vmem [#allocation6], %s234
        %p236 = pneg %p86
        %p237 = pneg %p83
        %p238 = pneg %p107
        %p239 = pneg %p104
        %p240 = pneg %p133
        %p241 = pneg %p130
        %s242 = sand.u32 %s120, 1
        %s243 = scalar_lea.sflag [#allocation5], %s242
        %s244 = sand.u32 %s120, 1
        %s245 = scalar_lea.vmem [#allocation8], %s244
        %p246 = scmp.eq.s32.totalorder %s28, 0
        // Predicated region
        $region41: #{tpu_custom_call.1} parent=31 // pred_check
          %p247 = pneg %p246
        $region42: #{tpu_custom_call.1} parent=31 // pred_check_branch
          %249 = sbr.rel (%p247) target = $region44
        $region43: #{tpu_custom_call.1} parent=31 // pred_region
          %250 = vst [vmem:[#allocation2] sm:$0xff] 0.0
        $region44: #{tpu_custom_call.1} parent=31 // pred_fallthru
          _
        %v251 = vld [vmem:[%s2] sm:$0xff]
        %v252 = vld [vmem:[%s208] sm:$0xf]
        %vm253 = vcmask 31744
        %v255 = vsel %vm253, %v251, 0
        %vm257 = vcmask 1043456
        %v259 = vsel %vm257, %v252, 0
        %261 = vmatpush.msra.mxu0 0.0
        %262 = vmatpush.msra.mxu0 0.0
        %263 = vmatpush.msra.mxu0 0.0
        %264 = vmatpush.msra.mxu0 0.0
        %265 = vmatpush.msra.mxu0 0.0
        %266 = vmatpush.msra.mxu0 0.0
        %267 = vmatpush.msra.mxu0 0.0
        %268 = vmatpush.msra.mxu0 0.0
        %269 = vmatpush.msra.mxu0 0.0
        %270 = vmatpush.msra.mxu0 0.0
        %271 = vmatpush.msra.mxu0 0.0
        %272 = vmatpush.msra.mxu0 0.0
        %273 = vmatpush.msra.mxu0 0.0
        %274 = vmatpush.msra.mxu0 0.0
        %275 = vmatpush.msra.mxu0 0.0
        %276 = vmatpush.msra.mxu0 %v259
        %277 = vmatmul.f32.gmra.mxu0 %v255
        %v278 = vpop.f32.mrf.mxu0
        %v279 = vadd.f32 0.0, %v278
        %280 = vdwg.mxu0
        %v281 = vld [vmem:[%s218] sm:$0xff]
        %v282 = vsub.f32 %v279, %v281
        %v283 = vmul.f32 %v282, %v282
        %v284 = vld [vmem:[#allocation2] sm:$0xff]
        %v285 = vadd.f32 %v284, %v283
        %286 = vst [vmem:[#allocation2] sm:$0xff] %v285
        %p287 = scmp.eq.s32.totalorder %s28, 1
        // Predicated region
        $region45: #{tpu_custom_call.1} parent=31 // pred_check
          %p288 = pneg %p287
        $region46: #{tpu_custom_call.1} parent=31 // pred_check_branch
          %290 = sbr.rel (%p288) target = $region48
        $region47: #{tpu_custom_call.1} parent=31 // pred_region
          %v291 = vld [vmem:[#allocation2] sm:$0xff]
          %292 = vadd.xlane.f32.xlu0 %v291
          %v293 = vpop.xlane.xlu0 %292
          %v294 = vrot.slane %v293, 4
          %v295 = vadd.f32 %v293, %v294
          %v296 = vrot.slane %v295, 2
          %v297 = vadd.f32 %v295, %v296
          %v298 = vrot.slane %v297, 1
          %v299 = vadd.f32 %v297, %v298
          %s300 = vtos %v299
          %v301 = vstv %s300
          %302 = vst [vmem:[%s245] sm:$0x1] %v301
        $region48: #{tpu_custom_call.1} parent=31 // pred_fallthru
          _
        %s303 = sand.u32 %s120, 1
        %s304 = scalar_lea.sflag [#allocation5], %s303
        %s305 = sand.u32 %s120, 1
        %s306 = scalar_lea.vmem [#allocation8], %s305
        // Predicated region
        $region49: #{tpu_custom_call.1} parent=31 // pred_check
          %p307 = pneg %p130
        $region50: #{tpu_custom_call.1} parent=31 // pred_check_branch
          %309 = sbr.rel (%p307) target = $region52
        $region51: #{tpu_custom_call.1} parent=31 // pred_region
          %311 = vsyncadd %s304, 0
          %s312 = scalar_lea.hbm %s3, %s27
          %s314 = sshll.u32 %s306, 4
          %s315 = int_to_ptr.vmem [resolvable:$true] %s314
          %s316 = sshll.u32 %s312, 4
          %s317 = int_to_ptr.hbm [resolvable:$true] %s316
          %319 = dma.vmem_to_hbm [thread:$0]  %s315, 16, %s317, %s304
        $region52: #{tpu_custom_call.1} parent=31 // pred_fallthru
          _
      $region32: #{tpu_custom_call.1} parent=5 // pred_fallthru
        _
      %p320 = scmp.le.s32.totalorder 2, %s18
      // Predicated region
      $region53: #{tpu_custom_call.1} parent=5 // pred_check
        %p321 = pneg %p320
      $region54: #{tpu_custom_call.1} parent=5 // pred_check_branch
        %323 = sbr.rel (%p321) target = $region56
      $region55: #{tpu_custom_call.1} parent=5 // pred_region
        %s324 = ssub.s32 %s18, 2
        // Predicated region
        $region57: #{tpu_custom_call.1} parent=55 // pred_check
          %p325 = pneg %p136
        $region58: #{tpu_custom_call.1} parent=55 // pred_check_branch
          %327 = sbr.rel (%p325) target = $region60
        $region59: #{tpu_custom_call.1} parent=55 // pred_region
          %s328 = sand.u32 %s121, 1
          %s329 = scalar_lea.sflag [#allocation5], %s328
          %s330 = sand.u32 %s121, 1
          %s331 = scalar_lea.vmem [#allocation8], %s330
          %333 = dma.done %s329, 16
        $region60: #{tpu_custom_call.1} parent=55 // pred_fallthru
          _
      $region56: #{tpu_custom_call.1} parent=5 // pred_fallthru
        _
    $region6: #{tpu_custom_call.1} parent=1 // loop_footer
      %s22 = sadd.s32 1, %s18
    $region7: #{tpu_custom_call.1} parent=1 // loop_footer_branch
      %17 = sbr.rel target = $region3
    $region8: #{tpu_custom_call.1} parent=1 // loop_exit
      _
    %334 = vsyncpa [#allocation4], 1
    %s335 = scalar_lea.sflag [#allocation4], 1
    %336 = vsyncpa %s335, 1
    %337 = vsyncpa [#allocation7], 1
    %s338 = scalar_lea.sflag [#allocation7], 1
    %339 = vsyncpa %s338, 1
    %340 = vsyncpa [#allocation5], 1
    %s341 = scalar_lea.sflag [#allocation5], 1
    %342 = vsyncpa %s341, 1

</llo_original>
